<compile_context>
chip_gen: v5e
topology: v5e:2x2
jax: 0.10.0
libtpu: 0.0.40
codegen_flags: <defaults>
</compile_context>

<pallas_src>
import functools

import jax
import jax.numpy as jnp
from jax import lax
from jax.experimental import pallas as pl
from jax.experimental.pallas import tpu as pltpu

NUM_CLASSES = 10
FEAT_DIM = 512
S_SCALE = 64.0
M_MARGIN = 1.25  # per the module spec (outside the usual CosFace range, kept as-is)
# (out_channels, num_blocks, first_block_stride)
STAGES = ((64, 2, 1), (128, 2, 2), (256, 2, 2), (512, 2, 2))

TM = 256        # M tile (rows of the im2col matrix)
TK_MAX = 2048   # max K tile (reduction); picked as a 128-multiple divisor of padded K


def _round_up(x, m):
    return (x + m - 1) // m * m


def _pick_tk(kp):
    """kp is a multiple of 128; return the largest 128-multiple divisor of kp <= TK_MAX."""
    if kp <= TK_MAX:
        return kp
    for tk in range(TK_MAX - TK_MAX % 128, 127, -128):
        if kp % tk == 0:
            return tk
    return 128


# ----------------------------------------------------------------------------
# Pallas tiled matmul (used for every conv via im2col): bf16 MXU, f32 accumulation
# ----------------------------------------------------------------------------
def _matmul_kernel(a_ref, b_ref, o_ref):
    # Output block is resident across the K grid axis (same block index) -> accumulate in place.
    @pl.when(pl.program_id(1) == 0)
    def _():
        o_ref[...] = jnp.zeros_like(o_ref)

    o_ref[...] += jnp.dot(a_ref[...], b_ref[...], preferred_element_type=jnp.float32)


def matmul_pallas(a, b):
    """a: [M, K], b: [K, N] -> [M, N] f32.  Operands are fed to the MXU as bf16."""
    M, K = a.shape
    K2, N = b.shape
    assert K == K2
    a = a.astype(jnp.bfloat16)
    b = b.astype(jnp.bfloat16)

    # Full-width lane-dense N block (Cout <= 512): no j grid axis, unmasked output stores.
    Np = _round_up(max(N, 128), 128)
    # K padded to the next 128 multiple only when needed (large-K layers already divide).
    Kp = _round_up(K, 128)
    if Kp != K:
        a = jnp.pad(a, ((0, 0), (0, Kp - K)))
    if Kp != K or Np != N:
        b = jnp.pad(b, ((0, Kp - K), (0, Np - N)))

    tk = _pick_tk(Kp)
    nk = Kp // tk
    tm = min(TM, _round_up(M, 8))          # no M padding: cdiv grid, partial tail tile
    nm = pl.cdiv(M, tm)

    out = pl.pallas_call(
        _matmul_kernel,
        out_shape=jax.ShapeDtypeStruct((M, Np), jnp.float32),
        grid_spec=pltpu.PrefetchScalarGridSpec(
            num_scalar_prefetch=0,
            grid=(nm, nk),
            in_specs=[
                pl.BlockSpec((tm, tk), lambda i, k: (i, k)),
                pl.BlockSpec((tk, Np), lambda i, k: (k, 0)),
            ],
            out_specs=pl.BlockSpec((tm, Np), lambda i, k: (i, 0)),
        ),
        compiler_params=pltpu.CompilerParams(
            dimension_semantics=("parallel", "arbitrary")
        ),
    )(a, b)
    return out[:, :N] if Np != N else out


# ----------------------------------------------------------------------------
# 3D conv = channel-last im2col (XLA glue, no transpose) + Pallas matmul (hot path)
# ----------------------------------------------------------------------------
def conv3d(x, w, stride=1, padding=1):
    """x: [B, D, H, W, Cin] (channel-last); w: [Cout, Cin, kd, kh, kw] (PyTorch layout)."""
    B = x.shape[0]
    Cout = w.shape[0]
    ksize = w.shape[2:]
    # Cast activations to bf16 BEFORE patch extraction so the (27x larger) im2col tensor is
    # materialized directly in bf16; with NDHWC the K dim is already last (lane-contiguous).
    patches = lax.conv_general_dilated_patches(
        x.astype(jnp.bfloat16),
        ksize,
        (stride,) * 3,
        [(padding, padding)] * 3,
        dimension_numbers=("NDHWC", "DHWIO", "NDHWC"),
    )
    _, Do, Ho, Wo, Kdim = patches.shape
    a = patches.reshape(B * Do * Ho * Wo, Kdim)                     # layout-free reshape
    wm = jnp.transpose(w.reshape(Cout, Kdim)).astype(jnp.bfloat16)  # [K, Cout] (tiny)
    out = matmul_pallas(a, wm)                                      # [M, Cout] f32
    return out.reshape(B, Do, Ho, Wo, Cout)


def batchnorm(x, bn, eps=1e-5):
    # training-mode batch statistics (glue: cheap per-channel reductions), channel-last
    mean = jnp.mean(x, axis=(0, 1, 2, 3), keepdims=True)
    var = jnp.var(x, axis=(0, 1, 2, 3), keepdims=True)
    xh = (x - mean) * lax.rsqrt(var + eps)
    g = bn["gamma"].reshape(1, 1, 1, 1, -1)
    b = bn["beta"].reshape(1, 1, 1, 1, -1)
    return xh * g + b


def basic_block(x, p, stride):
    out = jax.nn.relu(batchnorm(conv3d(x, p["conv1"], stride, 1), p["bn1"]))
    out = batchnorm(conv3d(out, p["conv2"], 1, 1), p["bn2"])
    if "down_conv" in p:
        shortcut = batchnorm(conv3d(x, p["down_conv"], stride, 0), p["down_bn"])
    else:
        shortcut = x
    return jax.nn.relu(out + shortcut)


def backbone(params, x):
    # x: [B, D, H, W, C] channel-last
    x = jax.nn.relu(batchnorm(conv3d(x, params["stem"], 1, 1), params["stem_bn"]))
    for stage_p, (_, nblocks, stride) in zip(params["stages"], STAGES):
        for bi in range(nblocks):
            s = stride if bi == 0 else 1
            x = basic_block(x, stage_p[bi], s)
    # global average pool over (D, H, W) -> [B, 512]
    return jnp.mean(x, axis=(1, 2, 3))


# ----------------------------------------------------------------------------
# Fused Pallas head kernel: one MXU dot over [fc | normalized-LMCL] -> CE + CosFace CE
# ----------------------------------------------------------------------------
def _head_kernel(x_ref, wcat_ref, bcat_ref, oh2_ref, out_ref, *, s, m, c):
    x = x_ref[...]                                     # [B, 512] f32
    oh2 = oh2_ref[...]                                 # [B, 128]: one-hot at col y and col c+y
    col = lax.broadcasted_iota(jnp.int32, oh2.shape, 1)
    mask_a = col < c                                   # fc logits live in cols [0, c)
    mask_b = jnp.logical_and(col >= c, col < 2 * c)    # cosine logits live in cols [c, 2c)
    neg = jnp.float32(-1e30)

    # single MXU pass over the concatenated (padded-to-128) weight slab
    z = jnp.dot(x, wcat_ref[...], preferred_element_type=jnp.float32)   # [B, 128]
    inv_xn = lax.rsqrt(jnp.sum(x * x, axis=-1, keepdims=True) + 1e-12)  # 1 / ||x||

    def ce(raw_logits, mask):
        logits = jnp.where(mask, raw_logits, neg)
        oh = jnp.where(mask, oh2, 0.0)
        mx = jnp.max(logits, axis=-1, keepdims=True)
        ex = jnp.where(mask, jnp.exp(logits - mx), 0.0)
        lse = mx + jnp.log(jnp.sum(ex, axis=-1, keepdims=True))
        return lse - jnp.sum(logits * oh, axis=-1, keepdims=True)       # [B, 1]

    loss_a = ce(z + bcat_ref[...], mask_a)                      # CrossEntropy(fc_(x), labels)
    loss_b = ce(s * (z * inv_xn - m * oh2), mask_b)             # LMCL / CosFace CE
    per = loss_a + 0.1 * loss_b                                 # [B, 1]
    out_ref[...] = jnp.broadcast_to(per, out_ref.shape)         # lane-dense store


def head_loss_pallas(feats, fc_w, fc_b, lmcl_w, labels):
    B = feats.shape[0]
    C = NUM_CLASSES
    Cp = 128
    assert 2 * C <= Cp
    # column-normalize the LMCL class weights (tiny; done in the wrapper)
    wn = lmcl_w * lax.rsqrt(jnp.sum(lmcl_w * lmcl_w, axis=1, keepdims=True) + 1e-12)
    wcat = jnp.zeros((FEAT_DIM, Cp), jnp.float32)
    wcat = wcat.at[:, :C].set(jnp.transpose(fc_w))
    wcat = wcat.at[:, C:2 * C].set(jnp.transpose(wn))
    bcat = jnp.zeros((1, Cp), jnp.float32).at[:, :C].set(fc_b.reshape(1, C))
    oh = jax.nn.one_hot(labels, C, dtype=jnp.float32)
    oh2 = jnp.zeros((B, Cp), jnp.float32).at[:, :C].set(oh).at[:, C:2 * C].set(oh)

    kernel = functools.partial(_head_kernel, s=S_SCALE, m=M_MARGIN, c=C)
    out = pl.pallas_call(
        kernel,
        out_shape=jax.ShapeDtypeStruct((B, Cp), jnp.float32),
        in_specs=[pl.BlockSpec(memory_space=pltpu.MemorySpace.VMEM)] * 4,
        out_specs=pl.BlockSpec(memory_space=pltpu.MemorySpace.VMEM),
    )(feats.astype(jnp.float32), wcat, bcat, oh2)
    # mean over batch (glue): mean(a_i + 0.1*b_i) == mean(a) + 0.1*mean(b)
    return jnp.mean(out[:, 0])


# ----------------------------------------------------------------------------
# Deterministic parameter init (PyTorch OIDHW conv layout retained)
# ----------------------------------------------------------------------------
def _conv_init(key, cout, cin, k):
    fan_in = cin * k * k * k
    return jax.random.normal(key, (cout, cin, k, k, k), jnp.float32) * (2.0 / fan_in) ** 0.5


def _bn_init(c):
    return {"gamma": jnp.ones((c,), jnp.float32), "beta": jnp.zeros((c,), jnp.float32)}


def _block_init(key, cin, cout, stride):
    k1, k2, k3 = jax.random.split(key, 3)
    p = {
        "conv1": _conv_init(k1, cout, cin, 3),
        "bn1": _bn_init(cout),
        "conv2": _conv_init(k2, cout, cout, 3),
        "bn2": _bn_init(cout),
    }
    if stride != 1 or cin != cout:
        p["down_conv"] = _conv_init(k3, cout, cin, 1)
        p["down_bn"] = _bn_init(cout)
    return p


def init_params(key):
    keys = iter(jax.random.split(key, 32))
    params = {"stem": _conv_init(next(keys), 64, 3, 3), "stem_bn": _bn_init(64)}
    stages = []
    cin = 64
    for (cout, nblocks, stride) in STAGES:
        blocks = []
        for bi in range(nblocks):
            s = stride if bi == 0 else 1
            blocks.append(_block_init(next(keys), cin, cout, s))
            cin = cout
        stages.append(blocks)
    params["stages"] = stages
    bound = 1.0 / (FEAT_DIM ** 0.5)
    params["fc_w"] = jax.random.uniform(next(keys), (NUM_CLASSES, FEAT_DIM), jnp.float32, -bound, bound)
    params["fc_b"] = jax.random.uniform(next(keys), (NUM_CLASSES,), jnp.float32, -bound, bound)
    params["lmcl_w"] = jax.random.normal(next(keys), (NUM_CLASSES, FEAT_DIM), jnp.float32) * 0.05
    return params


# ----------------------------------------------------------------------------
# Module forward (mirrors Conv3D.forward); accepts PyTorch NCDHW input
# ----------------------------------------------------------------------------
@functools.partial(jax.jit, static_argnames=("test",))
def conv3d_forward(params, x, labels=None, test=False):
    x = jnp.transpose(x, (0, 2, 3, 4, 1))             # NCDHW -> NDHWC (once, tiny input)
    feats = backbone(params, x)                       # [B, 512]
    if test:
        return feats
    loss = head_loss_pallas(feats, params["fc_w"], params["fc_b"], params["lmcl_w"], labels)
    return {"conv": feats, "loss": loss}


if __name__ == "__main__":
    key = jax.random.PRNGKey(0)
    kx, kl, kp = jax.random.split(key, 3)
    # video-like input (PyTorch layout): [batch=2, channels=3, depth=4, height=16, width=16]
    x = jax.random.normal(kx, (2, 3, 4, 16, 16), jnp.float32)
    labels = jax.random.randint(kl, (2,), 0, NUM_CLASSES)
    params = init_params(kp)

    # One-off numerical check: Pallas im2col conv vs lax.conv_general_dilated reference.
    kc1, kc2 = jax.random.split(jax.random.PRNGKey(1))
    xt = jax.random.normal(kc1, (1, 4, 6, 6, 3), jnp.float32)
    wt = jax.random.normal(kc2, (8, 3, 3, 3, 3), jnp.float32) * 0.1
    ref = lax.conv_general_dilated(
        xt.astype(jnp.bfloat16),
        jnp.transpose(wt, (2, 3, 4, 1, 0)).astype(jnp.bfloat16),
        (2, 2, 2), [(1, 1)] * 3,
        dimension_numbers=("NDHWC", "DHWIO", "NDHWC"),
        preferred_element_type=jnp.float32,
    )
    got = conv3d(xt, wt, stride=2, padding=1)
    assert jnp.allclose(got, ref, rtol=3e-2, atol=3e-2), "Pallas conv3d mismatch vs reference"

    out = conv3d_forward(params, x, labels)
    out = jax.block_until_ready(out)

    assert out["conv"].shape == (2, FEAT_DIM)
    assert out["loss"].shape == ()
    assert bool(jnp.isfinite(out["loss"]))
    print("KERNEL_OK")
</pallas_src>

<mosaic_0001>
module attributes {stable_mosaic.version = 11 : i64} {
  func.func @_matmul_kernel(%arg0: i32, %arg1: i32, %arg2: memref<24x128xbf16, #tpu.memory_space<vmem>>, %arg3: memref<128x128xbf16, #tpu.memory_space<vmem>>, %arg4: memref<24x128xf32, #tpu.memory_space<vmem>>) attributes {dimension_semantics = [#tpu.dimension_semantics<parallel>, #tpu.dimension_semantics<arbitrary>], iteration_bounds = array<i64: 1, 1>, scalar_prefetch = 0 : i64, scratch_operands = 0 : i64, tpu.core_type = #tpu.core_type<tc>, window_params = [{transform_indices = @transform_0, window_bounds = array<i64: 24, 128>}, {transform_indices = @transform_1, window_bounds = array<i64: 128, 128>}, {transform_indices = @transform_2, window_bounds = array<i64: 24, 128>}]} {
    %c0_i32 = arith.constant 0 : i32
    %0 = arith.cmpi eq, %arg1, %c0_i32 : i32
    %1 = arith.extui %0 : i1 to i32
    %c0_i32_0 = arith.constant 0 : i32
    %2 = arith.cmpi ne, %1, %c0_i32_0 : i32
    scf.if %2 {
      %cst_8 = arith.constant 0.000000e+00 : f32
      %9 = vector.broadcast %cst_8 : f32 to vector<24x128xf32>
      %c0_9 = arith.constant 0 : index
      %c0_10 = arith.constant 0 : index
      %10 = vector.load %arg4[%c0_9, %c0_10] : memref<24x128xf32, #tpu.memory_space<vmem>>, vector<24x128xf32>
      tpu.vector_store %arg4[%c0_9, %c0_10], %9 {strides = array<i32>} : memref<24x128xf32, #tpu.memory_space<vmem>>, vector<24x128xf32>,
    } else {
    }
    %c0 = arith.constant 0 : index
    %c0_1 = arith.constant 0 : index
    %3 = vector.load %arg4[%c0, %c0_1] : memref<24x128xf32, #tpu.memory_space<vmem>>, vector<24x128xf32>
    %c0_2 = arith.constant 0 : index
    %c0_3 = arith.constant 0 : index
    %4 = vector.load %arg2[%c0_2, %c0_3] : memref<24x128xbf16, #tpu.memory_space<vmem>>, vector<24x128xbf16>
    %c0_4 = arith.constant 0 : index
    %c0_5 = arith.constant 0 : index
    %5 = vector.load %arg3[%c0_4, %c0_5] : memref<128x128xbf16, #tpu.memory_space<vmem>>, vector<128x128xbf16>
    %cst = arith.constant dense<0.000000e+00> : vector<24x128xf32>
    %6 = tpu.matmul %4, %5, %cst {dimension_numbers = #tpu.dot_dimension_numbers<[1], [0], [0], [1], [0, 0, 1, 1], [], []>} : vector<24x128xbf16>, vector<128x128xbf16>, vector<24x128xf32> -> vector<24x128xf32>
    %7 = arith.addf %3, %6 : vector<24x128xf32>
    %c0_6 = arith.constant 0 : index
    %c0_7 = arith.constant 0 : index
    %8 = vector.load %arg4[%c0_6, %c0_7] : memref<24x128xf32, #tpu.memory_space<vmem>>, vector<24x128xf32>
    tpu.vector_store %arg4[%c0_6, %c0_7], %7 {strides = array<i32>} : memref<24x128xf32, #tpu.memory_space<vmem>>, vector<24x128xf32>,
    return
  }
  func.func @transform_0(%arg0: i32, %arg1: i32) -> (i32, i32) {
    %c0_i32 = arith.constant 0 : i32
    return %arg0, %arg1 : i32, i32
  }
  func.func @transform_1(%arg0: i32, %arg1: i32) -> (i32, i32) {
    %c0_i32 = arith.constant 0 : i32
    %c0_i32_0 = arith.constant 0 : i32
    return %arg1, %c0_i32 : i32, i32
  }
  func.func @transform_2(%arg0: i32, %arg1: i32) -> (i32, i32) {
    %c0_i32 = arith.constant 0 : i32
    %c0_i32_0 = arith.constant 0 : i32
    return %arg0, %c0_i32 : i32, i32
  }
}

</mosaic_0001>

<llo_original>
// kernel: tpu_custom_call.1
$region0: #{tpu_custom_call.1}
  #allocation0 [shape = 'u32[]', space=smem, size = 0x4, offset = 0x4, fixed_abs, tag = 'smem constant byte address 0x4 - core index']
  #allocation1 [shape = 'u32[72,128]{1,0:T(1,128)}', space=vmem, size = 0x9000, scoped, tag = 'internal scratch']
  %s0 = inlined_call_operand.hbm [shape: bf16[18,128], index: 0, kind: input, shape index: {}]
  %s1 = inlined_call_operand.hbm [shape: bf16[128,128], index: 1, kind: input, shape index: {}]
  %s2 = inlined_call_operand.hbm [shape: f32[18,128], index: 2, kind: output, shape index: {}]
  %s3 = sld [smem:[#allocation0]]
  $region30: #{tpu_custom_call.1} parent=0
    _
  %s5 = ssub.s32 1, %s3
  %s6 = scalar_select 0, %s5, %s3
  $region1: #{tpu_custom_call.1} parent=0
    #allocation2 [shape = 'u8[6144]{0}', space=vmem, size = 0x1800, scoped, tag = 'input window, operand 0, single buffered']
    #allocation3 [shape = 's32[1]{0}', space=sflag, size = 0x4, scoped, tag = 'scoped memory for tpu_custom_call.1']
    #allocation4 [shape = 's32[1]{0}', space=sflag, size = 0x4, scoped, tag = 'scoped memory for tpu_custom_call.1']
    #allocation5 [shape = 'u8[32768]{0}', space=vmem, size = 0x8000, scoped, tag = 'input window, operand 1, single buffered']
    #allocation6 [shape = 's32[1]{0}', space=sflag, size = 0x4, scoped, tag = 'scoped memory for tpu_custom_call.1']
    #allocation7 [shape = 'u8[12288]{0}', space=vmem, size = 0x3000, scoped, tag = 'output window, operand 0, single buffered']
    %7 = vsyncpa [#allocation3], 0
    %8 = vsyncpa [#allocation6], 0
    %9 = vsyncpa [#allocation4], 0
    // Predicated region
    $region2: #{tpu_custom_call.1} parent=1 // pred_check
      _
    $region3: #{tpu_custom_call.1} parent=1 // pred_check_branch
      %11 = sbr.rel (0) target = $region5
    $region4: #{tpu_custom_call.1} parent=1 // pred_region
      %13 = vsyncadd [#allocation3], 0
      %s14 = sshll.u32 %s0, 4
      %s15 = int_to_ptr.hbm [resolvable:$true] %s14
      %s16 = sshll.u32 [#allocation2], 4
      %s17 = int_to_ptr.vmem [resolvable:$true] %s16
      %22 = dma.hbm_to_vmem [thread:$0]  %s15, 192, %s17, [#allocation3], 64, 64, 4
    $region5: #{tpu_custom_call.1} parent=1 // pred_fallthru
      _
    // Predicated region
    $region6: #{tpu_custom_call.1} parent=1 // pred_check
      _
    $region7: #{tpu_custom_call.1} parent=1 // pred_check_branch
      %24 = sbr.rel (0) target = $region9
    $region8: #{tpu_custom_call.1} parent=1 // pred_region
      %26 = vsyncadd [#allocation6], 0
      %s27 = sshll.u32 %s1, 4
      %s28 = int_to_ptr.hbm [resolvable:$true] %s27
      %s29 = sshll.u32 [#allocation5], 4
      %s30 = int_to_ptr.vmem [resolvable:$true] %s29
      %35 = dma.hbm_to_vmem [thread:$0]  %s28, 1024, %s30, [#allocation6], 64, 64, 4
    $region9: #{tpu_custom_call.1} parent=1 // pred_fallthru
      _
    // Predicated region
    $region10: #{tpu_custom_call.1} parent=1 // pred_check
      _
    $region11: #{tpu_custom_call.1} parent=1 // pred_check_branch
      %37 = sbr.rel (0) target = $region13
    $region12: #{tpu_custom_call.1} parent=1 // pred_region
      %39 = dma.done [#allocation3], 192
    $region13: #{tpu_custom_call.1} parent=1 // pred_fallthru
      _
    // Predicated region
    $region14: #{tpu_custom_call.1} parent=1 // pred_check
      _
    $region15: #{tpu_custom_call.1} parent=1 // pred_check_branch
      %41 = sbr.rel (0) target = $region17
    $region16: #{tpu_custom_call.1} parent=1 // pred_region
      %43 = dma.done [#allocation6], 1024
    $region17: #{tpu_custom_call.1} parent=1 // pred_fallthru
      _
    %p44 = scmp.eq.s32.totalorder 0, 0
    // Predicated region
    $region18: #{tpu_custom_call.1} parent=1 // pred_check
      %p45 = pneg %p44
    $region19: #{tpu_custom_call.1} parent=1 // pred_check_branch
      %47 = sbr.rel (%p45) target = $region21
    $region20: #{tpu_custom_call.1} parent=1 // pred_region
      %48 = vst [vmem:[#allocation7] sm:$0xff] 0.0
      %49 = vst [vmem:[#allocation7 + $0x8] sm:$0xff] 0.0
      %50 = vst [vmem:[#allocation7 + $0x10] sm:$0xff] 0.0
    $region21: #{tpu_custom_call.1} parent=1 // pred_fallthru
      _
    %v51 = vld [vmem:[#allocation7] sm:$0xff]
    %v52 = vld [vmem:[#allocation7 + $0x8] sm:$0xff]
    %v53 = vld [vmem:[#allocation7 + $0x10] sm:$0xff]
    %v54 = vld [vmem:[#allocation2] sm:$0xf]
    %v55 = vld [vmem:[#allocation2 + $0x4] sm:$0xf]
    %v56 = vld [vmem:[#allocation2 + $0x8] sm:$0xf]
    %v57 = vld [vmem:[#allocation5] sm:$0xf]
    %v58 = vld [vmem:[#allocation5 + $0x4] sm:$0xf]
    %v59 = vld [vmem:[#allocation5 + $0x8] sm:$0xf]
    %v60 = vld [vmem:[#allocation5 + $0xc] sm:$0xf]
    %v61 = vld [vmem:[#allocation5 + $0x10] sm:$0xf]
    %v62 = vld [vmem:[#allocation5 + $0x14] sm:$0xf]
    %v63 = vld [vmem:[#allocation5 + $0x18] sm:$0xf]
    %v64 = vld [vmem:[#allocation5 + $0x1c] sm:$0xf]
    %v65 = vld [vmem:[#allocation5 + $0x20] sm:$0xf]
    %v66 = vld [vmem:[#allocation5 + $0x24] sm:$0xf]
    %v67 = vld [vmem:[#allocation5 + $0x28] sm:$0xf]
    %v68 = vld [vmem:[#allocation5 + $0x2c] sm:$0xf]
    %v69 = vld [vmem:[#allocation5 + $0x30] sm:$0xf]
    %v70 = vld [vmem:[#allocation5 + $0x34] sm:$0xf]
    %v71 = vld [vmem:[#allocation5 + $0x38] sm:$0xf]
    %v72 = vld [vmem:[#allocation5 + $0x3c] sm:$0xf]
    %v76 = vunpack.c.l.b16 %v54
    %v77 = vunpack.c.l.b16 %v55
    %v78 = vunpack.c.l.b16 %v56
    %v79 = vpack.c.b16 %v77, %v76
    %v80 = vpack.c.b16 %v78, %v78
    %v99 = vunpack.c.l.b16 %v57
    %v100 = vunpack.c.l.b16 %v58
    %v101 = vunpack.c.l.b16 %v59
    %v102 = vunpack.c.l.b16 %v60
    %v103 = vunpack.c.l.b16 %v61
    %v104 = vunpack.c.l.b16 %v62
    %v105 = vunpack.c.l.b16 %v63
    %v106 = vunpack.c.l.b16 %v64
    %v107 = vunpack.c.l.b16 %v65
    %v108 = vunpack.c.l.b16 %v66
    %v109 = vunpack.c.l.b16 %v67
    %v110 = vunpack.c.l.b16 %v68
    %v111 = vunpack.c.l.b16 %v69
    %v112 = vunpack.c.l.b16 %v70
    %v113 = vunpack.c.l.b16 %v71
    %v114 = vunpack.c.l.b16 %v72
    %v115 = vpack.c.b16 %v100, %v99
    %v116 = vpack.c.b16 %v102, %v101
    %v117 = vpack.c.b16 %v104, %v103
    %v118 = vpack.c.b16 %v106, %v105
    %v119 = vpack.c.b16 %v108, %v107
    %v120 = vpack.c.b16 %v110, %v109
    %v121 = vpack.c.b16 %v112, %v111
    %v122 = vpack.c.b16 %v114, %v113
    %131 = vmatpush.bf16.msra.mxu0 %v122
    %132 = vmatpush.bf16.msra.mxu0 %v121
    %133 = vmatpush.bf16.msra.mxu0 %v120
    %134 = vmatpush.bf16.msra.mxu0 %v119
    %135 = vmatpush.bf16.msra.mxu0 %v118
    %136 = vmatpush.bf16.msra.mxu0 %v117
    %137 = vmatpush.bf16.msra.mxu0 %v116
    %138 = vmatpush.bf16.msra.mxu0 %v115
    %139 = vmatmul.bf16.gmra.mxu0 %v79
    %v140 = vpop.f32.mrf.mxu0
    %v141 = vadd.f32 0.0, %v140
    %v142 = vpop.f32.mrf.mxu0
    %v143 = vadd.f32 0.0, %v142
    %144 = vmatmul.bf16.gmra.mxu0 %v80
    %v145 = vpop.f32.mrf.mxu0
    %v146 = vadd.f32 0.0, %v145
    %v147 = vpop.f32.mrf.mxu0
    %148 = vdwg.mxu0
    %v149 = vadd.f32 %v51, %v141
    %v150 = vadd.f32 %v52, %v143
    %v151 = vadd.f32 %v53, %v146
    %152 = vst [vmem:[#allocation7] sm:$0xff] %v149
    %153 = vst [vmem:[#allocation7 + $0x8] sm:$0xff] %v150
    %154 = vst [vmem:[#allocation7 + $0x10] sm:$0xff] %v151
    // Predicated region
    $region22: #{tpu_custom_call.1} parent=1 // pred_check
      _
    $region23: #{tpu_custom_call.1} parent=1 // pred_check_branch
      %156 = sbr.rel (0) target = $region25
    $region24: #{tpu_custom_call.1} parent=1 // pred_region
      %158 = vsyncadd [#allocation4], 0
      %s159 = sshll.u32 [#allocation7], 4
      %s160 = int_to_ptr.vmem [resolvable:$true] %s159
      %s161 = sshll.u32 %s2, 4
      %s162 = int_to_ptr.hbm [resolvable:$true] %s161
      %167 = dma.vmem_to_hbm [thread:$0]  %s160, 384, %s162, [#allocation4], 128, 128, 8
    $region25: #{tpu_custom_call.1} parent=1 // pred_fallthru
      _
    // Predicated region
    $region26: #{tpu_custom_call.1} parent=1 // pred_check
      _
    $region27: #{tpu_custom_call.1} parent=1 // pred_check_branch
      %169 = sbr.rel (0) target = $region29
    $region28: #{tpu_custom_call.1} parent=1 // pred_region
      %171 = dma.done [#allocation4], 384
    $region29: #{tpu_custom_call.1} parent=1 // pred_fallthru
      _
    %172 = vsyncpa [#allocation3], 1
    %173 = vsyncpa [#allocation6], 1
    %174 = vsyncpa [#allocation4], 1

</llo_original>
